<compile_context>
chip_gen: v7x
topology: tpu7x:2x2x1
jax: 0.10.0
libtpu: 0.0.40
codegen_flags: <defaults>
</compile_context>

<pallas_src>
import functools

import numpy as np
import jax
import jax.numpy as jnp
from jax import lax
from jax.experimental import pallas as pl
from jax.experimental.pallas import tpu as pltpu


def _round_up(x, m):
    return ((x + m - 1) // m) * m


def _segment_allmax(x, seg):
    """Exact all-MAX within contiguous `seg`-lane segments along the last axis.

    `seg` is a power of two dividing the 128-lane axis.  Cyclic roll butterfly on the XLU; a
    rolled lane-index iota selects, per lane, whichever rolled copy originated inside the lane's
    own segment, so correctness does not depend on pltpu.roll's rotate direction.
    """
    n = x.shape[-1]
    axis = x.ndim - 1
    shift_bits = seg.bit_length() - 1            # seg is a power of two
    lane = lax.broadcasted_iota(jnp.int32, x.shape, axis)
    seg_id = lane >> shift_bits
    s = 1
    while s < seg:
        a = pltpu.roll(x, s, axis)
        b = pltpu.roll(x, (s - seg) % n, axis)   # wrapped-within-segment partner
        a_src = pltpu.roll(lane, s, axis)        # true source lane of `a`, whatever the direction
        in_seg = (a_src >> shift_bits) == seg_id
        x = jnp.maximum(x, jnp.where(in_seg, a, b))
        s *= 2
    return x


def _gating_kernel(x_ref, w1_ref, b1_ref, w2_ref, b2_ref, ones_ref, o_ref, *, num_experts):
    # Folded linear1: [bm_f, F*D] @ [F*D, F*H] -> f32 accumulate, + bias, ReLU.
    # x is cast to bf16 in-kernel (single MXU pass) so the wrapper never adds an HBM pass over x.
    x = x_ref[...]
    if x.dtype != jnp.bfloat16:
        x = x.astype(jnp.bfloat16)
    h = jnp.dot(x, w1_ref[...], preferred_element_type=jnp.float32)
    h = jnp.maximum(h + b1_ref[...], 0.0)
    # Folded linear2 as one bf16 MXU pass: [bm_f, F*H] @ [F*H, 128] -> f32 logits (lane-dense).
    logits = jnp.dot(h.astype(jnp.bfloat16), w2_ref[...],
                     preferred_element_type=jnp.float32) + b2_ref[...]
    # Per-original-row softmax == per-num_experts-lane-segment softmax (numerically stable).
    seg_max = _segment_allmax(logits, num_experts)                    # XLU butterfly (stability)
    unnorm = jnp.exp(logits - seg_max)                                # EUP
    # Segment sum as a matmul against a resident block-diagonal ones matrix (MXU, not XLU).
    seg_sum = jnp.dot(unnorm, ones_ref[...], preferred_element_type=jnp.float32)
    o_ref[...] = (unnorm * pl.reciprocal(seg_sum, approx=True)).astype(o_ref.dtype)


@functools.partial(jax.jit, static_argnames=("block_rows", "out_dtype"))
def gating_network_forward(x, w1, b1, w2, b2, *, block_rows=16384, out_dtype=jnp.float32):
    """softmax(relu(x @ w1 + b1) @ w2 + b2) along the last axis.

    x: [..., input_size]; w1: [input_size, hidden]; w2: [hidden, num_experts]
    (weights stored transposed vs. PyTorch nn.Linear).  Returns [..., num_experts].
    Pass out_dtype=jnp.bfloat16 to halve store-side HBM traffic if the consumer accepts bf16
    (probabilities then sum to 1 only to ~1e-3; approx reciprocal is used either way).
    """
    orig_shape = x.shape
    input_size = orig_shape[-1]
    hidden = w1.shape[1]
    num_experts = w2.shape[1]

    if 128 % num_experts != 0:
        # TODO(synk): non power-of-two / >128 expert counts need a non-folded fallback path.
        raise NotImplementedError("num_experts must divide 128 for the folded kernel")
    fold = 128 // num_experts                      # batch rows folded per 128-lane row

    # Flatten leading dims; pad only up to row_align (16 sublanes of folded rows, bf16-safe),
    # never to a multiple of the block -- the ragged tail is handled by a cdiv grid instead.
    xb = x.reshape(-1, input_size)
    batch = xb.shape[0]
    row_align = 16 * fold
    padded = _round_up(batch, row_align)
    if padded != batch:
        xb = jnp.pad(xb, ((0, padded - batch), (0, 0)))
    x_f = xb.reshape(padded // fold, fold * input_size)   # free row-major reshape
    rows_f = padded // fold                                # always a multiple of 16

    # Folded-row tile: as large as the (double-buffered x + out) VMEM budget allows, but keep
    # at least 2 grid steps when there is enough work so v7x's two TensorCores both get fed.
    bytes_per_frow = fold * input_size * x_f.dtype.itemsize + 128 * np.dtype(out_dtype).itemsize
    max_bm_f = max(16, (12 * 1024 * 1024) // (2 * bytes_per_frow) // 16 * 16)
    target_bm_f = min(max(16, _round_up(block_rows // fold, 16)), max_bm_f)
    bm_f = min(target_bm_f, _round_up(pl.cdiv(rows_f, 2), 16))
    grid = (pl.cdiv(rows_f, bm_f),)

    # Block-diagonal ("folded") weights -- tiny, resident in VMEM across the whole grid.
    eye = jnp.eye(fold, dtype=jnp.float32)
    w1_f = jnp.kron(eye, w1.astype(jnp.float32)).astype(jnp.bfloat16)   # [fold*D, fold*H]
    b1_f = jnp.tile(b1.astype(jnp.float32), fold).reshape(1, fold * hidden)
    w2_f = jnp.kron(eye, w2.astype(jnp.float32)).astype(jnp.bfloat16)   # [fold*H, 128]
    b2_f = jnp.tile(b2.astype(jnp.float32), fold).reshape(1, 128)
    ones_bd = jnp.kron(eye, jnp.ones((num_experts, num_experts), jnp.float32))  # [128, 128]

    kernel = functools.partial(_gating_kernel, num_experts=num_experts)

    out_f = pl.pallas_call(
        kernel,
        out_shape=jax.ShapeDtypeStruct((rows_f, 128), out_dtype),
        grid_spec=pltpu.PrefetchScalarGridSpec(
            num_scalar_prefetch=0,
            grid=grid,
            in_specs=[
                pl.BlockSpec((bm_f, fold * input_size), lambda i: (i, 0)),            # x (streamed)
                pl.BlockSpec((fold * input_size, fold * hidden), lambda i: (0, 0)),   # w1 (resident)
                pl.BlockSpec((1, fold * hidden), lambda i: (0, 0)),                   # b1
                pl.BlockSpec((fold * hidden, 128), lambda i: (0, 0)),                 # w2
                pl.BlockSpec((1, 128), lambda i: (0, 0)),                             # b2
                pl.BlockSpec((128, 128), lambda i: (0, 0)),                           # ones (seg-sum)
            ],
            out_specs=pl.BlockSpec((bm_f, 128), lambda i: (i, 0)),                    # lane-dense probs
        ),
        compiler_params=pltpu.CompilerParams(
            dimension_semantics=("parallel",),
            vmem_limit_bytes=32 * 1024 * 1024,   # v5e's scoped default is only 16 MiB
        ),
    )(x_f, w1_f, b1_f, w2_f, b2_f, ones_bd)

    # Unfold back to [..., num_experts] and drop padding (free reshapes + a slice).
    probs = out_f.reshape(padded, num_experts)[:batch]
    return probs.reshape(*orig_shape[:-1], num_experts)


def init_params(key, input_size, num_experts, hidden=4):
    """Deterministic synthetic init matching nn.Linear shapes (weights stored transposed)."""
    k1, k2, k3, k4 = jax.random.split(key, 4)
    s1 = 1.0 / jnp.sqrt(input_size)
    s2 = 1.0 / jnp.sqrt(hidden)
    w1 = jax.random.uniform(k1, (input_size, hidden), jnp.float32, -s1, s1)
    b1 = jax.random.uniform(k2, (hidden,), jnp.float32, -s1, s1)
    w2 = jax.random.uniform(k3, (hidden, num_experts), jnp.float32, -s2, s2)
    b2 = jax.random.uniform(k4, (num_experts,), jnp.float32, -s2, s2)
    return w1, b1, w2, b2


if __name__ == "__main__":
    key = jax.random.PRNGKey(0)
    input_size = 32
    num_experts = 8
    batch_dims = (4, 96)       # 384 rows: exercises flatten, pad-to-row_align, 2-step grid

    kx, kp = jax.random.split(key)
    x = jax.random.normal(kx, (*batch_dims, input_size), jnp.float32)
    w1, b1, w2, b2 = init_params(kp, input_size, num_experts)

    probs = gating_network_forward(x, w1, b1, w2, b2)
    probs = jax.block_until_ready(probs)

    # Pure-JAX reference mirroring the kernel's precision choices (bf16 MXU inputs, f32 accum).
    f32 = jnp.float32
    xr = x.astype(jnp.bfloat16).astype(f32)
    w1r = w1.astype(jnp.bfloat16).astype(f32)
    h_ref = jnp.maximum(jnp.dot(xr, w1r, precision="highest") + b1, 0.0)
    hr = h_ref.astype(jnp.bfloat16).astype(f32)
    w2r = w2.astype(jnp.bfloat16).astype(f32)
    ref = jax.nn.softmax(jnp.dot(hr, w2r, precision="highest") + b2, axis=-1)

    assert probs.shape == (*batch_dims, num_experts)
    assert bool(jnp.all(jnp.isfinite(probs)))
    max_err = float(jnp.max(jnp.abs(probs - ref)))
    assert jnp.allclose(probs, ref, atol=5e-3, rtol=1e-2), max_err
    assert jnp.allclose(jnp.sum(probs, axis=-1), 1.0, atol=5e-3)

    print("KERNEL_OK")
</pallas_src>

<mosaic_0001>
module attributes {stable_mosaic.version = 11 : i64} {
  func.func @_gating_kernel(%arg0: i32, %arg1: memref<16x512xf32, #tpu.memory_space<vmem>>, %arg2: memref<512x64xbf16, #tpu.memory_space<vmem>>, %arg3: memref<1x64xf32, #tpu.memory_space<vmem>>, %arg4: memref<64x128xbf16, #tpu.memory_space<vmem>>, %arg5: memref<1x128xf32, #tpu.memory_space<vmem>>, %arg6: memref<128x128xf32, #tpu.memory_space<vmem>>, %arg7: memref<16x128xf32, #tpu.memory_space<vmem>>) attributes {dimension_semantics = [#tpu.dimension_semantics<parallel>], iteration_bounds = array<i64: 2>, scalar_prefetch = 0 : i64, scratch_operands = 0 : i64, tpu.core_type = #tpu.core_type<tc>, window_params = [{transform_indices = @transform_0, window_bounds = array<i64: 16, 512>}, {pipeline_mode = #tpu.pipeline_mode<synchronous>, transform_indices = @transform_1, window_bounds = array<i64: 512, 64>}, {pipeline_mode = #tpu.pipeline_mode<synchronous>, transform_indices = @transform_2, window_bounds = array<i64: 1, 64>}, {pipeline_mode = #tpu.pipeline_mode<synchronous>, transform_indices = @transform_3, window_bounds = array<i64: 64, 128>}, {pipeline_mode = #tpu.pipeline_mode<synchronous>, transform_indices = @transform_4, window_bounds = array<i64: 1, 128>}, {pipeline_mode = #tpu.pipeline_mode<synchronous>, transform_indices = @transform_5, window_bounds = array<i64: 128, 128>}, {transform_indices = @transform_6, window_bounds = array<i64: 16, 128>}]} {
    %c0 = arith.constant 0 : index
    %c0_0 = arith.constant 0 : index
    %0 = vector.load %arg1[%c0, %c0_0] : memref<16x512xf32, #tpu.memory_space<vmem>>, vector<16x512xf32>
    %1 = arith.truncf %0 : vector<16x512xf32> to vector<16x512xbf16>
    %c0_1 = arith.constant 0 : index
    %c0_2 = arith.constant 0 : index
    %2 = vector.load %arg2[%c0_1, %c0_2] : memref<512x64xbf16, #tpu.memory_space<vmem>>, vector<512x64xbf16>
    %cst = arith.constant dense<0.000000e+00> : vector<16x64xf32>
    %3 = tpu.matmul %1, %2, %cst {dimension_numbers = #tpu.dot_dimension_numbers<[1], [0], [0], [1], [0, 0, 1, 1], [], []>} : vector<16x512xbf16>, vector<512x64xbf16>, vector<16x64xf32> -> vector<16x64xf32>
    %c0_3 = arith.constant 0 : index
    %c0_4 = arith.constant 0 : index
    %4 = vector.load %arg3[%c0_3, %c0_4] : memref<1x64xf32, #tpu.memory_space<vmem>>, vector<1x64xf32>
    %5 = vector.broadcast %4 : vector<1x64xf32> to vector<16x64xf32>
    %6 = arith.addf %3, %5 : vector<16x64xf32>
    %cst_5 = arith.constant 0.000000e+00 : f32
    %7 = vector.broadcast %cst_5 : f32 to vector<16x64xf32>
    %8 = arith.maximumf %6, %7 : vector<16x64xf32>
    %9 = arith.truncf %8 : vector<16x64xf32> to vector<16x64xbf16>
    %c0_6 = arith.constant 0 : index
    %c0_7 = arith.constant 0 : index
    %10 = vector.load %arg4[%c0_6, %c0_7] : memref<64x128xbf16, #tpu.memory_space<vmem>>, vector<64x128xbf16>
    %cst_8 = arith.constant dense<0.000000e+00> : vector<16x128xf32>
    %11 = tpu.matmul %9, %10, %cst_8 {dimension_numbers = #tpu.dot_dimension_numbers<[1], [0], [0], [1], [0, 0, 1, 1], [], []>} : vector<16x64xbf16>, vector<64x128xbf16>, vector<16x128xf32> -> vector<16x128xf32>
    %c0_9 = arith.constant 0 : index
    %c0_10 = arith.constant 0 : index
    %12 = vector.load %arg5[%c0_9, %c0_10] : memref<1x128xf32, #tpu.memory_space<vmem>>, vector<1x128xf32>
    %13 = vector.broadcast %12 : vector<1x128xf32> to vector<16x128xf32>
    %14 = arith.addf %11, %13 : vector<16x128xf32>
    %15 = tpu.iota {dimensions = array<i32: 1>} : vector<16x128xi32>
    %c3_i32 = arith.constant 3 : i32
    %16 = vector.broadcast %c3_i32 : i32 to vector<16x128xi32>
    %17 = arith.shrsi %15, %16 : vector<16x128xi32>
    %c1_i32 = arith.constant 1 : i32
    %18 = tpu.dynamic_rotate %14 by %c1_i32 dim 1 : vector<16x128xf32>, i32 -> vector<16x128xf32>
    %c121_i32 = arith.constant 121 : i32
    %19 = tpu.dynamic_rotate %14 by %c121_i32 dim 1 : vector<16x128xf32>, i32 -> vector<16x128xf32>
    %c1_i32_11 = arith.constant 1 : i32
    %20 = tpu.dynamic_rotate %15 by %c1_i32_11 dim 1 : vector<16x128xi32>, i32 -> vector<16x128xi32>
    %c3_i32_12 = arith.constant 3 : i32
    %21 = vector.broadcast %c3_i32_12 : i32 to vector<16x128xi32>
    %22 = arith.shrsi %20, %21 : vector<16x128xi32>
    %23 = arith.cmpi eq, %22, %17 : vector<16x128xi32>
    %24 = arith.select %23, %18, %19 : vector<16x128xi1>, vector<16x128xf32>
    %25 = arith.maximumf %14, %24 : vector<16x128xf32>
    %c2_i32 = arith.constant 2 : i32
    %26 = tpu.dynamic_rotate %25 by %c2_i32 dim 1 : vector<16x128xf32>, i32 -> vector<16x128xf32>
    %c122_i32 = arith.constant 122 : i32
    %27 = tpu.dynamic_rotate %25 by %c122_i32 dim 1 : vector<16x128xf32>, i32 -> vector<16x128xf32>
    %c2_i32_13 = arith.constant 2 : i32
    %28 = tpu.dynamic_rotate %15 by %c2_i32_13 dim 1 : vector<16x128xi32>, i32 -> vector<16x128xi32>
    %c3_i32_14 = arith.constant 3 : i32
    %29 = vector.broadcast %c3_i32_14 : i32 to vector<16x128xi32>
    %30 = arith.shrsi %28, %29 : vector<16x128xi32>
    %31 = arith.cmpi eq, %30, %17 : vector<16x128xi32>
    %32 = arith.select %31, %26, %27 : vector<16x128xi1>, vector<16x128xf32>
    %33 = arith.maximumf %25, %32 : vector<16x128xf32>
    %c4_i32 = arith.constant 4 : i32
    %34 = tpu.dynamic_rotate %33 by %c4_i32 dim 1 : vector<16x128xf32>, i32 -> vector<16x128xf32>
    %c124_i32 = arith.constant 124 : i32
    %35 = tpu.dynamic_rotate %33 by %c124_i32 dim 1 : vector<16x128xf32>, i32 -> vector<16x128xf32>
    %c4_i32_15 = arith.constant 4 : i32
    %36 = tpu.dynamic_rotate %15 by %c4_i32_15 dim 1 : vector<16x128xi32>, i32 -> vector<16x128xi32>
    %c3_i32_16 = arith.constant 3 : i32
    %37 = vector.broadcast %c3_i32_16 : i32 to vector<16x128xi32>
    %38 = arith.shrsi %36, %37 : vector<16x128xi32>
    %39 = arith.cmpi eq, %38, %17 : vector<16x128xi32>
    %40 = arith.select %39, %34, %35 : vector<16x128xi1>, vector<16x128xf32>
    %41 = arith.maximumf %33, %40 : vector<16x128xf32>
    %42 = arith.subf %14, %41 : vector<16x128xf32>
    %43 = math.exp %42 : vector<16x128xf32>
    %c0_17 = arith.constant 0 : index
    %c0_18 = arith.constant 0 : index
    %44 = vector.load %arg6[%c0_17, %c0_18] : memref<128x128xf32, #tpu.memory_space<vmem>>, vector<128x128xf32>
    %cst_19 = arith.constant dense<0.000000e+00> : vector<16x128xf32>
    %45 = tpu.matmul %43, %44, %cst_19 {dimension_numbers = #tpu.dot_dimension_numbers<[1], [0], [0], [1], [0, 0, 1, 1], [], []>} : vector<16x128xf32>, vector<128x128xf32>, vector<16x128xf32> -> vector<16x128xf32>
    %46 = tpu.reciprocal %45 {approx = true} : vector<16x128xf32> -> vector<16x128xf32>
    %47 = arith.mulf %43, %46 : vector<16x128xf32>
    %c0_20 = arith.constant 0 : index
    %c0_21 = arith.constant 0 : index
    %48 = vector.load %arg7[%c0_20, %c0_21] : memref<16x128xf32, #tpu.memory_space<vmem>>, vector<16x128xf32>
    tpu.vector_store %arg7[%c0_20, %c0_21], %47 {strides = array<i32>} : memref<16x128xf32, #tpu.memory_space<vmem>>, vector<16x128xf32>,
    return
  }
  func.func @transform_0(%arg0: i32) -> (i32, i32) {
    %c0_i32 = arith.constant 0 : i32
    %c0_i32_0 = arith.constant 0 : i32
    return %arg0, %c0_i32 : i32, i32
  }
  func.func @transform_1(%arg0: i32) -> (i32, i32) {
    %c0_i32 = arith.constant 0 : i32
    %c0_i32_0 = arith.constant 0 : i32
    %c0_i32_1 = arith.constant 0 : i32
    return %c0_i32, %c0_i32_0 : i32, i32
  }
  func.func @transform_2(%arg0: i32) -> (i32, i32) {
    %c0_i32 = arith.constant 0 : i32
    %c0_i32_0 = arith.constant 0 : i32
    %c0_i32_1 = arith.constant 0 : i32
    return %c0_i32, %c0_i32_0 : i32, i32
  }
  func.func @transform_3(%arg0: i32) -> (i32, i32) {
    %c0_i32 = arith.constant 0 : i32
    %c0_i32_0 = arith.constant 0 : i32
    %c0_i32_1 = arith.constant 0 : i32
    return %c0_i32, %c0_i32_0 : i32, i32
  }
  func.func @transform_4(%arg0: i32) -> (i32, i32) {
    %c0_i32 = arith.constant 0 : i32
    %c0_i32_0 = arith.constant 0 : i32
    %c0_i32_1 = arith.constant 0 : i32
    return %c0_i32, %c0_i32_0 : i32, i32
  }
  func.func @transform_5(%arg0: i32) -> (i32, i32) {
    %c0_i32 = arith.constant 0 : i32
    %c0_i32_0 = arith.constant 0 : i32
    %c0_i32_1 = arith.constant 0 : i32
    return %c0_i32, %c0_i32_0 : i32, i32
  }
  func.func @transform_6(%arg0: i32) -> (i32, i32) {
    %c0_i32 = arith.constant 0 : i32
    %c0_i32_0 = arith.constant 0 : i32
    return %arg0, %c0_i32 : i32, i32
  }
}

</mosaic_0001>

<llo_original>
// kernel: tile.13
$region0: #{tile.13}
  #allocation0 [shape = 's32[1]{0}', space=sflag, size = 0x4, scoped, tag = 'scoped memory for tile.13']
  %s0 = inlined_call_operand.vmem [shape: f32[4], index: 0, kind: input, shape index: {}]
  %s1 = inlined_call_operand.vmem [shape: f32[16,4], index: 1, kind: output, shape index: {}]
  // Predicated region
  $region2: #{tile.13} parent=0 // pred_check
    _
  $region3: #{tile.13} parent=0 // pred_check_branch
    %3 = sbr.rel (0) target = $region5
  $region4: #{tile.13} parent=0 // pred_region
    _
  $region5: #{tile.13} parent=0 // pred_fallthru
    _
  %v4 = vld [vmem:[%s0] ss:$0 sm:$0xff]
  %5 = vst [vmem:[%s1] sm:$0xff] %v4
  %s6 = scalar_lea.vmem %s1, 8
  %7 = vst [vmem:[%s6] sm:$0xff] %v4

// kernel: tile.14
$region0: #{tile.14}
  %s0 = inlined_call_operand.vmem [shape: f32[16,4], index: 0, kind: input, shape index: {}]
  %s1 = inlined_call_operand.vmem [shape: f32[1,64], index: 1, kind: output, shape index: {}]
  $region1: #{tile.14} parent=0
    #allocation0 [shape = 'u8[4096]{0}', space=vmem, size = 0x1000, scoped, tag = 'scoped mem for output reshape']
    %v2 = vld [vmem:[%s0] sm:$0x1]
    %vm3 = vcmask 31744
    %4 = vst.msk [vmem:[#allocation0] sm:$0x1] %vm3, %v2
    %s5 = scalar_lea.vmem %s0, 15
    %v6 = vld [vmem:[%s5] sm:$0x1]
    %7 = vrot.lane.b32.xlu0 %v6, 60
    %v8 = vpop.permute.xlu0 %7
    %vm9 = vcmask 523744
    %10 = vst.msk [vmem:[#allocation0] sm:$0x1] %vm9, %v8
    %s11 = scalar_lea.vmem %s0, 14
    %v12 = vld [vmem:[%s11] sm:$0x1]
    %13 = vrot.lane.b32.xlu0 %v12, 56
    %v14 = vpop.permute.xlu0 %13
    %vm15 = vcmask 490944
    %16 = vst.msk [vmem:[#allocation0] sm:$0x1] %vm15, %v14
    %s17 = scalar_lea.vmem %s0, 13
    %v18 = vld [vmem:[%s17] sm:$0x1]
    %19 = vrot.lane.b32.xlu0 %v18, 52
    %v20 = vpop.permute.xlu0 %19
    %vm21 = vcmask 458144
    %22 = vst.msk [vmem:[#allocation0] sm:$0x1] %vm21, %v20
    %s23 = scalar_lea.vmem %s0, 12
    %v24 = vld [vmem:[%s23] sm:$0x1]
    %25 = vrot.lane.b32.xlu0 %v24, 48
    %v26 = vpop.permute.xlu0 %25
    %vm27 = vcmask 425344
    %28 = vst.msk [vmem:[#allocation0] sm:$0x1] %vm27, %v26
    %s29 = scalar_lea.vmem %s0, 11
    %v30 = vld [vmem:[%s29] sm:$0x1]
    %31 = vrot.lane.b32.xlu0 %v30, 44
    %v32 = vpop.permute.xlu0 %31
    %vm33 = vcmask 392544
    %34 = vst.msk [vmem:[#allocation0] sm:$0x1] %vm33, %v32
    %s35 = scalar_lea.vmem %s0, 10
    %v36 = vld [vmem:[%s35] sm:$0x1]
    %37 = vrot.lane.b32.xlu0 %v36, 40
    %v38 = vpop.permute.xlu0 %37
    %vm39 = vcmask 359744
    %40 = vst.msk [vmem:[#allocation0] sm:$0x1] %vm39, %v38
    %s41 = scalar_lea.vmem %s0, 9
    %v42 = vld [vmem:[%s41] sm:$0x1]
    %43 = vrot.lane.b32.xlu0 %v42, 36
    %v44 = vpop.permute.xlu0 %43
    %vm45 = vcmask 326944
    %46 = vst.msk [vmem:[#allocation0] sm:$0x1] %vm45, %v44
    %s47 = scalar_lea.vmem %s0, 8
    %v48 = vld [vmem:[%s47] sm:$0x1]
    %49 = vrot.lane.b32.xlu0 %v48, 32
    %v50 = vpop.permute.xlu0 %49
    %vm51 = vcmask 294144
    %52 = vst.msk [vmem:[#allocation0] sm:$0x1] %vm51, %v50
    %s53 = scalar_lea.vmem %s0, 7
    %v54 = vld [vmem:[%s53] sm:$0x1]
    %55 = vrot.lane.b32.xlu0 %v54, 28
    %v56 = vpop.permute.xlu0 %55
    %vm57 = vcmask 261344
    %58 = vst.msk [vmem:[#allocation0] sm:$0x1] %vm57, %v56
    %s59 = scalar_lea.vmem %s0, 6
    %v60 = vld [vmem:[%s59] sm:$0x1]
    %61 = vrot.lane.b32.xlu0 %v60, 24
    %v62 = vpop.permute.xlu0 %61
    %vm63 = vcmask 228544
    %64 = vst.msk [vmem:[#allocation0] sm:$0x1] %vm63, %v62
    %s65 = scalar_lea.vmem %s0, 5
    %v66 = vld [vmem:[%s65] sm:$0x1]
    %67 = vrot.lane.b32.xlu0 %v66, 20
    %v68 = vpop.permute.xlu0 %67
    %vm69 = vcmask 195744
    %70 = vst.msk [vmem:[#allocation0] sm:$0x1] %vm69, %v68
    %s71 = scalar_lea.vmem %s0, 4
    %v72 = vld [vmem:[%s71] sm:$0x1]
    %73 = vrot.lane.b32.xlu0 %v72, 16
    %v74 = vpop.permute.xlu0 %73
    %vm75 = vcmask 162944
    %76 = vst.msk [vmem:[#allocation0] sm:$0x1] %vm75, %v74
    %s77 = scalar_lea.vmem %s0, 3
    %v78 = vld [vmem:[%s77] sm:$0x1]
    %79 = vrot.lane.b32.xlu0 %v78, 12
    %v80 = vpop.permute.xlu0 %79
    %vm81 = vcmask 130144
    %82 = vst.msk [vmem:[#allocation0] sm:$0x1] %vm81, %v80
    %s83 = scalar_lea.vmem %s0, 2
    %v84 = vld [vmem:[%s83] sm:$0x1]
    %85 = vrot.lane.b32.xlu0 %v84, 8
    %v86 = vpop.permute.xlu0 %85
    %vm87 = vcmask 97344
    %88 = vst.msk [vmem:[#allocation0] sm:$0x1] %vm87, %v86
    %s89 = scalar_lea.vmem %s0, 1
    %v90 = vld [vmem:[%s89] sm:$0x1]
    %91 = vrot.lane.b32.xlu0 %v90, 4
    %v92 = vpop.permute.xlu0 %91
    %vm93 = vcmask 64544
    %94 = vst.msk [vmem:[#allocation0] sm:$0x1] %vm93, %v92
    %s96 = sshllo.u32 0, 1
    %v98 = vld [vmem:[#allocation0] sm:%s96]
    %s99 = sshllo.u32 0, 1
    %100 = vst [vmem:[%s1] sm:%s99] %v98

// kernel: tile.18
$region0: #{tile.18}
  #allocation0 [shape = 's32[1]{0}', space=sflag, size = 0x4, scoped, tag = 'scoped memory for tile.18']
  %s0 = inlined_call_operand.vmem [shape: f32[8], index: 0, kind: input, shape index: {}]
  %s1 = inlined_call_operand.vmem [shape: f32[16,8], index: 1, kind: output, shape index: {}]
  // Predicated region
  $region2: #{tile.18} parent=0 // pred_check
    _
  $region3: #{tile.18} parent=0 // pred_check_branch
    %3 = sbr.rel (0) target = $region5
  $region4: #{tile.18} parent=0 // pred_region
    _
  $region5: #{tile.18} parent=0 // pred_fallthru
    _
  %v4 = vld [vmem:[%s0] ss:$0 sm:$0xff]
  %5 = vst [vmem:[%s1] sm:$0xff] %v4
  %s6 = scalar_lea.vmem %s1, 8
  %7 = vst [vmem:[%s6] sm:$0xff] %v4

// kernel: tile.19
$region0: #{tile.19}
  %s0 = inlined_call_operand.vmem [shape: f32[16,8], index: 0, kind: input, shape index: {}]
  %s1 = inlined_call_operand.vmem [shape: f32[1,128], index: 1, kind: output, shape index: {}]
  $region1: #{tile.19} parent=0
    #allocation0 [shape = 'u8[4096]{0}', space=vmem, size = 0x1000, scoped, tag = 'scoped mem for output reshape']
    %v2 = vld [vmem:[%s0] sm:$0x1]
    %vm3 = vcmask 64512
    %4 = vst.msk [vmem:[#allocation0] sm:$0x1] %vm3, %v2
    %s5 = scalar_lea.vmem %s0, 15
    %v6 = vld [vmem:[%s5] sm:$0x1]
    %7 = vrot.lane.b32.xlu0 %v6, 120
    %v8 = vpop.permute.xlu0 %7
    %vm9 = vcmask 1048512
    %10 = vst.msk [vmem:[#allocation0] sm:$0x1] %vm9, %v8
    %s11 = scalar_lea.vmem %s0, 14
    %v12 = vld [vmem:[%s11] sm:$0x1]
    %13 = vrot.lane.b32.xlu0 %v12, 112
    %v14 = vpop.permute.xlu0 %13
    %vm15 = vcmask 982912
    %16 = vst.msk [vmem:[#allocation0] sm:$0x1] %vm15, %v14
    %s17 = scalar_lea.vmem %s0, 13
    %v18 = vld [vmem:[%s17] sm:$0x1]
    %19 = vrot.lane.b32.xlu0 %v18, 104
    %v20 = vpop.permute.xlu0 %19
    %vm21 = vcmask 917312
    %22 = vst.msk [vmem:[#allocation0] sm:$0x1] %vm21, %v20
    %s23 = scalar_lea.vmem %s0, 12
    %v24 = vld [vmem:[%s23] sm:$0x1]
    %25 = vrot.lane.b32.xlu0 %v24, 96
    %v26 = vpop.permute.xlu0 %25
    %vm27 = vcmask 851712
    %28 = vst.msk [vmem:[#allocation0] sm:$0x1] %vm27, %v26
    %s29 = scalar_lea.vmem %s0, 11
    %v30 = vld [vmem:[%s29] sm:$0x1]
    %31 = vrot.lane.b32.xlu0 %v30, 88
    %v32 = vpop.permute.xlu0 %31
    %vm33 = vcmask 786112
    %34 = vst.msk [vmem:[#allocation0] sm:$0x1] %vm33, %v32
    %s35 = scalar_lea.vmem %s0, 10
    %v36 = vld [vmem:[%s35] sm:$0x1]
    %37 = vrot.lane.b32.xlu0 %v36, 80
    %v38 = vpop.permute.xlu0 %37
    %vm39 = vcmask 720512
    %40 = vst.msk [vmem:[#allocation0] sm:$0x1] %vm39, %v38
    %s41 = scalar_lea.vmem %s0, 9
    %v42 = vld [vmem:[%s41] sm:$0x1]
    %43 = vrot.lane.b32.xlu0 %v42, 72
    %v44 = vpop.permute.xlu0 %43
    %vm45 = vcmask 654912
    %46 = vst.msk [vmem:[#allocation0] sm:$0x1] %vm45, %v44
    %s47 = scalar_lea.vmem %s0, 8
    %v48 = vld [vmem:[%s47] sm:$0x1]
    %49 = vrot.lane.b32.xlu0 %v48, 64
    %v50 = vpop.permute.xlu0 %49
    %vm51 = vcmask 589312
    %52 = vst.msk [vmem:[#allocation0] sm:$0x1] %vm51, %v50
    %s53 = scalar_lea.vmem %s0, 7
    %v54 = vld [vmem:[%s53] sm:$0x1]
    %55 = vrot.lane.b32.xlu0 %v54, 56
    %v56 = vpop.permute.xlu0 %55
    %vm57 = vcmask 523712
    %58 = vst.msk [vmem:[#allocation0] sm:$0x1] %vm57, %v56
    %s59 = scalar_lea.vmem %s0, 6
    %v60 = vld [vmem:[%s59] sm:$0x1]
    %61 = vrot.lane.b32.xlu0 %v60, 48
    %v62 = vpop.permute.xlu0 %61
    %vm63 = vcmask 458112
    %64 = vst.msk [vmem:[#allocation0] sm:$0x1] %vm63, %v62
    %s65 = scalar_lea.vmem %s0, 5
    %v66 = vld [vmem:[%s65] sm:$0x1]
    %67 = vrot.lane.b32.xlu0 %v66, 40
    %v68 = vpop.permute.xlu0 %67
    %vm69 = vcmask 392512
    %70 = vst.msk [vmem:[#allocation0] sm:$0x1] %vm69, %v68
    %s71 = scalar_lea.vmem %s0, 4
    %v72 = vld [vmem:[%s71] sm:$0x1]
    %73 = vrot.lane.b32.xlu0 %v72, 32
    %v74 = vpop.permute.xlu0 %73
    %vm75 = vcmask 326912
    %76 = vst.msk [vmem:[#allocation0] sm:$0x1] %vm75, %v74
    %s77 = scalar_lea.vmem %s0, 3
    %v78 = vld [vmem:[%s77] sm:$0x1]
    %79 = vrot.lane.b32.xlu0 %v78, 24
    %v80 = vpop.permute.xlu0 %79
    %vm81 = vcmask 261312
    %82 = vst.msk [vmem:[#allocation0] sm:$0x1] %vm81, %v80
    %s83 = scalar_lea.vmem %s0, 2
    %v84 = vld [vmem:[%s83] sm:$0x1]
    %85 = vrot.lane.b32.xlu0 %v84, 16
    %v86 = vpop.permute.xlu0 %85
    %vm87 = vcmask 195712
    %88 = vst.msk [vmem:[#allocation0] sm:$0x1] %vm87, %v86
    %s89 = scalar_lea.vmem %s0, 1
    %v90 = vld [vmem:[%s89] sm:$0x1]
    %91 = vrot.lane.b32.xlu0 %v90, 8
    %v92 = vpop.permute.xlu0 %91
    %vm93 = vcmask 130112
    %94 = vst.msk [vmem:[#allocation0] sm:$0x1] %vm93, %v92
    %s96 = sshllo.u32 0, 1
    %v98 = vld [vmem:[#allocation0] sm:%s96]
    %s99 = sshllo.u32 0, 1
    %100 = vst [vmem:[%s1] sm:%s99] %v98

// kernel: gating_network_forward.1
$region0: #{gating_network_forward.1}
  #allocation0 [shape = 'u32[]', space=smem, size = 0x4, offset = 0x4, fixed_abs, tag = 'smem constant byte address 0x4 - core index']
  #allocation1 [shape = 'u32[144,128]{1,0:T(1,128)}', space=vmem, size = 0x12000, scoped, tag = 'internal scratch']
  %s0 = inlined_call_operand.vmem [shape: f32[32,512], index: 0, kind: input, shape index: {}]
  %s1 = inlined_call_operand.vmem [shape: bf16[512,64], index: 1, kind: input, shape index: {}]
  %s2 = inlined_call_operand.vmem [shape: f32[1,64], index: 2, kind: input, shape index: {}]
  %s3 = inlined_call_operand.vmem [shape: bf16[64,128], index: 3, kind: input, shape index: {}]
  %s4 = inlined_call_operand.vmem [shape: f32[1,128], index: 4, kind: input, shape index: {}]
  %s5 = inlined_call_operand.vmem [shape: f32[128,128], index: 5, kind: input, shape index: {}]
  %s6 = inlined_call_operand.vmem [shape: f32[32,128], index: 6, kind: output, shape index: {}]
  %s7 = sld [smem:[#allocation0]]
  $region57: #{gating_network_forward.1} parent=0
    _
  %s9 = ssub.s32 1, %s7
  %s10 = scalar_select 0, %s9, %s7
  loop: start=0, step=1, limit=4
  $region2: #{gating_network_forward.1} parent=0 // loop_pre_header
    _
  $region3: #{gating_network_forward.1} parent=0 // loop_header
    %s12 = sphi 0, %s16
    %p13 = scmp.ge.s32.totalorder %s12, 4
    %s22 = sphi 0, %s24
    %s25 = sphi 0, %s22
    %s26 = sphi 0, %s25
    %s42 = sphi 0, %s26
    %s46 = sphi 0, %s46
    %s48 = sphi 0, %s46
    %s49 = sphi 0, %s48
    %s63 = sphi 0, %s49
    %s67 = sphi 0, %s67
    %s69 = sphi 0, %s67
    %s70 = sphi 0, %s69
    %s84 = sphi 0, %s70
    %s88 = sphi 0, %s88
    %s90 = sphi 0, %s88
    %s91 = sphi 0, %s90
    %s105 = sphi 0, %s91
    %s109 = sphi 0, %s109
    %s111 = sphi 0, %s109
    %s112 = sphi 0, %s111
    %s126 = sphi 0, %s112
    %s130 = sphi 0, %s130
    %s132 = sphi 0, %s130
    %s133 = sphi 0, %s132
    %s147 = sphi 0, %s133
    %s153 = sphi 0, %s155
    %s156 = sphi 0, %s153
    %s157 = sphi 0, %s156
    %s173 = sphi 0, %s157
  $region4: #{gating_network_forward.1} parent=0 // loop_header_branch
    %15 = sbr.rel (%p13) target = $region8
  $region5: #{gating_network_forward.1} parent=0 // loop_body
    %s17 = ssub.s32 %s12, 1
    %s18 = ssub.s32 %s12, 2
    %s19 = sadd.s32 %s12, 1
    %s20 = ssub.s32 %s12, %s19
    %p21 = scmp.eq.s32.totalorder %s20, 0
    %s23 = sadd.s32 %s22, 1
    %s24 = scalar_select %p21, %s22, %s23
    %p27 = pneg %p21
    %p28 = scmp.eq.s32.totalorder %s12, 1
    %p29 = por %p27, %p28
    %p30 = scmp.ne.s32.totalorder %s22, %s25
    %p31 = scmp.eq.s32.totalorder %s12, 0
    %p32 = por %p30, %p31
    %p33 = scmp.ne.s32.totalorder %s22, %s25
    %p34 = scmp.eq.s32.totalorder %s17, 1
    %p35 = por %p33, %p34
    %p36 = scmp.ne.s32.totalorder %s25, %s26
    %p37 = scmp.eq.s32.totalorder %s17, 0
    %p38 = por %p36, %p37
    %p39 = scmp.ne.s32.totalorder %s25, %s26
    %p40 = scmp.eq.s32.totalorder %s18, 1
    %p41 = por %p39, %p40
    %p43 = scmp.ne.s32.totalorder %s26, %s42
    %p44 = scmp.eq.s32.totalorder %s18, 0
    %p45 = por %p43, %p44
    %s47 = sadd.s32 %s46, 1
    %p50 = scmp.eq.s32.totalorder %s12, 1
    %p51 = scmp.ne.s32.totalorder %s46, %s48
    %p52 = scmp.eq.s32.totalorder %s12, 0
    %p53 = por %p51, %p52
    %p54 = scmp.ne.s32.totalorder %s46, %s48
    %p55 = scmp.eq.s32.totalorder %s17, 1
    %p56 = por %p54, %p55
    %p57 = scmp.ne.s32.totalorder %s48, %s49
    %p58 = scmp.eq.s32.totalorder %s17, 0
    %p59 = por %p57, %p58
    %p60 = scmp.ne.s32.totalorder %s48, %s49
    %p61 = scmp.eq.s32.totalorder %s18, 1
    %p62 = por %p60, %p61
    %p64 = scmp.ne.s32.totalorder %s49, %s63
    %p65 = scmp.eq.s32.totalorder %s18, 0
    %p66 = por %p64, %p65
    %s68 = sadd.s32 %s67, 1
    %p71 = scmp.eq.s32.totalorder %s12, 1
    %p72 = scmp.ne.s32.totalorder %s67, %s69
    %p73 = scmp.eq.s32.totalorder %s12, 0
    %p74 = por %p72, %p73
    %p75 = scmp.ne.s32.totalorder %s67, %s69
    %p76 = scmp.eq.s32.totalorder %s17, 1
    %p77 = por %p75, %p76
    %p78 = scmp.ne.s32.totalorder %s69, %s70
    %p79 = scmp.eq.s32.totalorder %s17, 0
    %p80 = por %p78, %p79
    %p81 = scmp.ne.s32.totalorder %s69, %s70
    %p82 = scmp.eq.s32.totalorder %s18, 1
    %p83 = por %p81, %p82
    %p85 = scmp.ne.s32.totalorder %s70, %s84
    %p86 = scmp.eq.s32.totalorder %s18, 0
    %p87 = por %p85, %p86
    %s89 = sadd.s32 %s88, 1
    %p92 = scmp.eq.s32.totalorder %s12, 1
    %p93 = scmp.ne.s32.totalorder %s88, %s90
    %p94 = scmp.eq.s32.totalorder %s12, 0
    %p95 = por %p93, %p94
    %p96 = scmp.ne.s32.totalorder %s88, %s90
    %p97 = scmp.eq.s32.totalorder %s17, 1
    %p98 = por %p96, %p97
    %p99 = scmp.ne.s32.totalorder %s90, %s91
    %p100 = scmp.eq.s32.totalorder %s17, 0
    %p101 = por %p99, %p100
    %p102 = scmp.ne.s32.totalorder %s90, %s91
    %p103 = scmp.eq.s32.totalorder %s18, 1
    %p104 = por %p102, %p103
    %p106 = scmp.ne.s32.totalorder %s91, %s105
    %p107 = scmp.eq.s32.totalorder %s18, 0
    %p108 = por %p106, %p107
    %s110 = sadd.s32 %s109, 1
    %p113 = scmp.eq.s32.totalorder %s12, 1
    %p114 = scmp.ne.s32.totalorder %s109, %s111
    %p115 = scmp.eq.s32.totalorder %s12, 0
    %p116 = por %p114, %p115
    %p117 = scmp.ne.s32.totalorder %s109, %s111
    %p118 = scmp.eq.s32.totalorder %s17, 1
    %p119 = por %p117, %p118
    %p120 = scmp.ne.s32.totalorder %s111, %s112
    %p121 = scmp.eq.s32.totalorder %s17, 0
    %p122 = por %p120, %p121
    %p123 = scmp.ne.s32.totalorder %s111, %s112
    %p124 = scmp.eq.s32.totalorder %s18, 1
    %p125 = por %p123, %p124
    %p127 = scmp.ne.s32.totalorder %s112, %s126
    %p128 = scmp.eq.s32.totalorder %s18, 0
    %p129 = por %p127, %p128
    %s131 = sadd.s32 %s130, 1
    %p134 = scmp.eq.s32.totalorder %s12, 1
    %p135 = scmp.ne.s32.totalorder %s130, %s132
    %p136 = scmp.eq.s32.totalorder %s12, 0
    %p137 = por %p135, %p136
    %p138 = scmp.ne.s32.totalorder %s130, %s132
    %p139 = scmp.eq.s32.totalorder %s17, 1
    %p140 = por %p138, %p139
    %p141 = scmp.ne.s32.totalorder %s132, %s133
    %p142 = scmp.eq.s32.totalorder %s17, 0
    %p143 = por %p141, %p142
    %p144 = scmp.ne.s32.totalorder %s132, %s133
    %p145 = scmp.eq.s32.totalorder %s18, 1
    %p146 = por %p144, %p145
    %p148 = scmp.ne.s32.totalorder %s133, %s147
    %p149 = scmp.eq.s32.totalorder %s18, 0
    %p150 = por %p148, %p149
    %s151 = ssub.s32 %s12, %s19
    %p152 = scmp.eq.s32.totalorder %s151, 0
    %s154 = sadd.s32 %s153, 1
    %s155 = scalar_select %p152, %s153, %s154
    %p158 = pneg %p152
    %p159 = scmp.eq.s32.totalorder %s12, 1
    %p160 = por %p158, %p159
    %p161 = scmp.ne.s32.totalorder %s153, %s156
    %p162 = scmp.eq.s32.totalorder %s12, 0
    %p163 = por %p161, %p162
    %p164 = scmp.ne.s32.totalorder %s153, %s156
    %p165 = scmp.eq.s32.totalorder %s17, 1
    %p166 = por %p164, %p165
    %p167 = scmp.ne.s32.totalorder %s156, %s157
    %p168 = scmp.eq.s32.totalorder %s17, 0
    %p169 = por %p167, %p168
    %p170 = scmp.ne.s32.totalorder %s156, %s157
    %p171 = scmp.eq.s32.totalorder %s18, 1
    %p172 = por %p170, %p171
    %p174 = scmp.ne.s32.totalorder %s157, %s173
    %p175 = scmp.eq.s32.totalorder %s18, 0
    %p176 = por %p174, %p175
    %p177 = scmp.le.s32.totalorder 1, %s12
    %p178 = scmp.lt.s32.totalorder %s12, 3
    %p179 = pnand %p177, %p178
    %p180 = pneg %p179
    // Predicated region
    $region9: #{gating_network_forward.1} parent=5 // pred_check
      _
    $region10: #{gating_network_forward.1} parent=5 // pred_check_branch
      %182 = sbr.rel (%p179) target = $region12
    $region11: #{gating_network_forward.1} parent=5 // pred_region
      %s183 = ssub.s32 %s12, 1
      // Predicated region
      $region13: #{gating_network_forward.1} parent=11 // pred_check
        %p184 = pneg %p59
      $region14: #{gating_network_forward.1} parent=11 // pred_check_branch
        %186 = sbr.rel (%p184) target = $region16
      $region15: #{gating_network_forward.1} parent=11 // pred_region
        _
      $region16: #{gating_network_forward.1} parent=11 // pred_fallthru
        _
      // Predicated region
      $region17: #{gating_network_forward.1} parent=11 // pred_check
        %p187 = pneg %p80
      $region18: #{gating_network_forward.1} parent=11 // pred_check_branch
        %189 = sbr.rel (%p187) target = $region20
      $region19: #{gating_network_forward.1} parent=11 // pred_region
        _
      $region20: #{gating_network_forward.1} parent=11 // pred_fallthru
        _
      // Predicated region
      $region21: #{gating_network_forward.1} parent=11 // pred_check
        %p190 = pneg %p101
      $region22: #{gating_network_forward.1} parent=11 // pred_check_branch
        %192 = sbr.rel (%p190) target = $region24
      $region23: #{gating_network_forward.1} parent=11 // pred_region
        _
      $region24: #{gating_network_forward.1} parent=11 // pred_fallthru
        _
      // Predicated region
      $region25: #{gating_network_forward.1} parent=11 // pred_check
        %p193 = pneg %p122
      $region26: #{gating_network_forward.1} parent=11 // pred_check_branch
        %195 = sbr.rel (%p193) target = $region28
      $region27: #{gating_network_forward.1} parent=11 // pred_region
        _
      $region28: #{gating_network_forward.1} parent=11 // pred_fallthru
        _
      // Predicated region
      $region29: #{gating_network_forward.1} parent=11 // pred_check
        %p196 = pneg %p143
      $region30: #{gating_network_forward.1} parent=11 // pred_check_branch
        %198 = sbr.rel (%p196) target = $region32
      $region31: #{gating_network_forward.1} parent=11 // pred_region
        _
      $region32: #{gating_network_forward.1} parent=11 // pred_fallthru
        _
    $region12: #{gating_network_forward.1} parent=5 // pred_fallthru
      _
    %p199 = scmp.lt.s32.totalorder %s12, 2
    // Predicated region
    $region33: #{gating_network_forward.1} parent=5 // pred_check
      %p200 = pneg %p199
    $region34: #{gating_network_forward.1} parent=5 // pred_check_branch
      %202 = sbr.rel (%p200) target = $region36
    $region35: #{gating_network_forward.1} parent=5 // pred_region
      // Predicated region
      $region37: #{gating_network_forward.1} parent=35 // pred_check
        %p203 = pneg %p32
      $region38: #{gating_network_forward.1} parent=35 // pred_check_branch
        %205 = sbr.rel (%p203) target = $region40
      $region39: #{gating_network_forward.1} parent=35 // pred_region
        %s206 = smul.u32 2, %s12
        %p207 = scmp.lt.s32.totalorder %s206, 3
        %s208 = scalar_select %p207, %s206, 3
        %s209 = smul.addr %s208, 4
        %s210 = smul.addr %s209, 8
        %s211 = scalar_lea.vmem %s0, %s210
        %s212 = smul.u32 2, %s12
      $region40: #{gating_network_forward.1} parent=35 // pred_fallthru
        _
    $region36: #{gating_network_forward.1} parent=5 // pred_fallthru
      _
    %p213 = scmp.le.s32.totalorder 1, %s12
    %p214 = scmp.lt.s32.totalorder %s12, 3
    %p215 = pnand %p213, %p214
    %p216 = pneg %p215
    // Predicated region
    $region41: #{gating_network_forward.1} parent=5 // pred_check
      _
    $region42: #{gating_network_forward.1} parent=5 // pred_check_branch
      %218 = sbr.rel (%p215) target = $region44
    $region43: #{gating_network_forward.1} parent=5 // pred_region
      %s219 = ssub.s32 %s12, 1
      %s220 = smul.u32 2, %s17
      %p221 = scmp.lt.s32.totalorder %s220, 3
      %s222 = scalar_select %p221, %s220, 3
      %s223 = smul.addr %s222, 4
      %s224 = smul.addr %s223, 8
      %s225 = scalar_lea.vmem %s0, %s224
      %p226 = pneg %p38
      %p227 = pneg %p35
      %p228 = pneg %p59
      %p229 = pneg %p56
      %p230 = pneg %p80
      %p231 = pneg %p77
      %p232 = pneg %p101
      %p233 = pneg %p98
      %p234 = pneg %p122
      %p235 = pneg %p119
      %p236 = pneg %p143
      %p237 = pneg %p140
      %p238 = pneg %p169
      %p239 = pneg %p166
      %s240 = smul.u32 2, %s17
      %p241 = scmp.lt.s32.totalorder %s240, 3
      %s242 = scalar_select %p241, %s240, 3
      %s243 = smul.addr %s242, 8
      %s244 = scalar_lea.vmem %s6, %s243
      %s245 = smul.u32 2, %s17
      %p246 = scmp.lt.s32.totalorder %s245, 3
      %s247 = scalar_select %p246, %s245, 3
      %s248 = smul.addr %s247, 4
      %s249 = smul.addr %s248, 8
      %s250 = scalar_lea.vmem %s0, %s249
      %s251 = smul.u32 2, %s17
      %s252 = smul.u32 2, %s17
      %p253 = scmp.lt.s32.totalorder %s252, 3
      %s254 = scalar_select %p253, %s252, 3
      %s255 = smul.addr %s254, 8
      %s256 = scalar_lea.vmem %s6, %s255
      %s257 = smul.u32 2, %s17
      %v259 = vld [vmem:[%s250] sm:$0xff]
      %v260 = vld [vmem:[%s250 + $0x8] sm:$0xff]
      %v261 = vld [vmem:[%s250 + $0x10] sm:$0xff]
      %v262 = vld [vmem:[%s250 + $0x18] sm:$0xff]
      %v263 = vld [vmem:[%s250 + $0x20] sm:$0xff]
      %v264 = vld [vmem:[%s250 + $0x28] sm:$0xff]
      %v265 = vld [vmem:[%s250 + $0x30] sm:$0xff]
      %v266 = vld [vmem:[%s250 + $0x38] sm:$0xff]
      %v267 = vpack.c.bf16 %v263, %v259
      %v268 = vpack.c.bf16 %v264, %v260
      %v269 = vpack.c.bf16 %v265, %v261
      %v270 = vpack.c.bf16 %v266, %v262
      %v271 = vld [vmem:[%s1] sm:$0xf]
      %v272 = vld [vmem:[%s1 + $0x4] sm:$0xf]
      %v273 = vld [vmem:[%s1 + $0x8] sm:$0xf]
      %v274 = vld [vmem:[%s1 + $0xc] sm:$0xf]
      %v275 = vld [vmem:[%s1 + $0x10] sm:$0xf]
      %v276 = vld [vmem:[%s1 + $0x14] sm:$0xf]
      %v277 = vld [vmem:[%s1 + $0x18] sm:$0xf]
      %v278 = vld [vmem:[%s1 + $0x1c] sm:$0xf]
      %v279 = vld [vmem:[%s1 + $0x20] sm:$0xf]
      %v280 = vld [vmem:[%s1 + $0x24] sm:$0xf]
      %v281 = vld [vmem:[%s1 + $0x28] sm:$0xf]
      %v282 = vld [vmem:[%s1 + $0x2c] sm:$0xf]
      %v283 = vld [vmem:[%s1 + $0x30] sm:$0xf]
      %v284 = vld [vmem:[%s1 + $0x34] sm:$0xf]
      %v285 = vld [vmem:[%s1 + $0x38] sm:$0xf]
      %v286 = vld [vmem:[%s1 + $0x3c] sm:$0xf]
      %v287 = vld [vmem:[%s1 + $0x40] sm:$0xf]
      %v288 = vld [vmem:[%s1 + $0x44] sm:$0xf]
      %v289 = vld [vmem:[%s1 + $0x48] sm:$0xf]
      %v290 = vld [vmem:[%s1 + $0x4c] sm:$0xf]
      %v291 = vld [vmem:[%s1 + $0x50] sm:$0xf]
      %v292 = vld [vmem:[%s1 + $0x54] sm:$0xf]
      %v293 = vld [vmem:[%s1 + $0x58] sm:$0xf]
      %v294 = vld [vmem:[%s1 + $0x5c] sm:$0xf]
      %v295 = vld [vmem:[%s1 + $0x60] sm:$0xf]
      %v296 = vld [vmem:[%s1 + $0x64] sm:$0xf]
      %v297 = vld [vmem:[%s1 + $0x68] sm:$0xf]
      %v298 = vld [vmem:[%s1 + $0x6c] sm:$0xf]
      %v299 = vld [vmem:[%s1 + $0x70] sm:$0xf]
      %v300 = vld [vmem:[%s1 + $0x74] sm:$0xf]
      %v301 = vld [vmem:[%s1 + $0x78] sm:$0xf]
      %v302 = vld [vmem:[%s1 + $0x7c] sm:$0xf]
      %v303 = vld [vmem:[%s1 + $0x80] sm:$0xf]
      %v304 = vld [vmem:[%s1 + $0x84] sm:$0xf]
      %v305 = vld [vmem:[%s1 + $0x88] sm:$0xf]
      %v306 = vld [vmem:[%s1 + $0x8c] sm:$0xf]
      %v307 = vld [vmem:[%s1 + $0x90] sm:$0xf]
      %v308 = vld [vmem:[%s1 + $0x94] sm:$0xf]
      %v309 = vld [vmem:[%s1 + $0x98] sm:$0xf]
      %v310 = vld [vmem:[%s1 + $0x9c] sm:$0xf]
      %v311 = vld [vmem:[%s1 + $0xa0] sm:$0xf]
      %v312 = vld [vmem:[%s1 + $0xa4] sm:$0xf]
      %v313 = vld [vmem:[%s1 + $0xa8] sm:$0xf]
      %v314 = vld [vmem:[%s1 + $0xac] sm:$0xf]
      %v315 = vld [vmem:[%s1 + $0xb0] sm:$0xf]
      %v316 = vld [vmem:[%s1 + $0xb4] sm:$0xf]
      %v317 = vld [vmem:[%s1 + $0xb8] sm:$0xf]
      %v318 = vld [vmem:[%s1 + $0xbc] sm:$0xf]
      %v319 = vld [vmem:[%s1 + $0xc0] sm:$0xf]
      %v320 = vld [vmem:[%s1 + $0xc4] sm:$0xf]
      %v321 = vld [vmem:[%s1 + $0xc8] sm:$0xf]
      %v322 = vld [vmem:[%s1 + $0xcc] sm:$0xf]
      %v323 = vld [vmem:[%s1 + $0xd0] sm:$0xf]
      %v324 = vld [vmem:[%s1 + $0xd4] sm:$0xf]
      %v325 = vld [vmem:[%s1 + $0xd8] sm:$0xf]
      %v326 = vld [vmem:[%s1 + $0xdc] sm:$0xf]
      %v327 = vld [vmem:[%s1 + $0xe0] sm:$0xf]
      %v328 = vld [vmem:[%s1 + $0xe4] sm:$0xf]
      %v329 = vld [vmem:[%s1 + $0xe8] sm:$0xf]
      %v330 = vld [vmem:[%s1 + $0xec] sm:$0xf]
      %v331 = vld [vmem:[%s1 + $0xf0] sm:$0xf]
      %v332 = vld [vmem:[%s1 + $0xf4] sm:$0xf]
      %v333 = vld [vmem:[%s1 + $0xf8] sm:$0xf]
      %v334 = vld [vmem:[%s1 + $0xfc] sm:$0xf]
      %v335 = vld [vmem:[%s2] sm:$0x1]
      %v337 = vlaneseq
      %v338 = vshrl.u32 %v337, 7
      %v339 = vsub.s32 0, %v338
      %v340 = vrot.slane %v335, %v339
      %v406 = vunpack.c.l.b16 %v271
      %v407 = vunpack.c.l.b16 %v272
      %v408 = vunpack.c.l.b16 %v273
      %v409 = vunpack.c.l.b16 %v274
      %v410 = vunpack.c.l.b16 %v275
      %v411 = vunpack.c.l.b16 %v276
      %v412 = vunpack.c.l.b16 %v277
      %v413 = vunpack.c.l.b16 %v278
      %v414 = vunpack.c.l.b16 %v279
      %v415 = vunpack.c.l.b16 %v280
      %v416 = vunpack.c.l.b16 %v281
      %v417 = vunpack.c.l.b16 %v282
      %v418 = vunpack.c.l.b16 %v283
      %v419 = vunpack.c.l.b16 %v284
      %v420 = vunpack.c.l.b16 %v285
      %v421 = vunpack.c.l.b16 %v286
      %v422 = vunpack.c.l.b16 %v287
      %v423 = vunpack.c.l.b16 %v288
      %v424 = vunpack.c.l.b16 %v289
      %v425 = vunpack.c.l.b16 %v290
      %v426 = vunpack.c.l.b16 %v291
      %v427 = vunpack.c.l.b16 %v292
      %v428 = vunpack.c.l.b16 %v293
      %v429 = vunpack.c.l.b16 %v294
      %v430 = vunpack.c.l.b16 %v295
      %v431 = vunpack.c.l.b16 %v296
      %v432 = vunpack.c.l.b16 %v297
      %v433 = vunpack.c.l.b16 %v298
      %v434 = vunpack.c.l.b16 %v299
      %v435 = vunpack.c.l.b16 %v300
      %v436 = vunpack.c.l.b16 %v301
      %v437 = vunpack.c.l.b16 %v302
      %v438 = vunpack.c.l.b16 %v303
      %v439 = vunpack.c.l.b16 %v304
      %v440 = vunpack.c.l.b16 %v305
      %v441 = vunpack.c.l.b16 %v306
      %v442 = vunpack.c.l.b16 %v307
      %v443 = vunpack.c.l.b16 %v308
      %v444 = vunpack.c.l.b16 %v309
      %v445 = vunpack.c.l.b16 %v310
      %v446 = vunpack.c.l.b16 %v311
      %v447 = vunpack.c.l.b16 %v312
      %v448 = vunpack.c.l.b16 %v313
      %v449 = vunpack.c.l.b16 %v314
      %v450 = vunpack.c.l.b16 %v315
      %v451 = vunpack.c.l.b16 %v316
      %v452 = vunpack.c.l.b16 %v317
      %v453 = vunpack.c.l.b16 %v318
      %v454 = vunpack.c.l.b16 %v319
      %v455 = vunpack.c.l.b16 %v320
      %v456 = vunpack.c.l.b16 %v321
      %v457 = vunpack.c.l.b16 %v322
      %v458 = vunpack.c.l.b16 %v323
      %v459 = vunpack.c.l.b16 %v324
      %v460 = vunpack.c.l.b16 %v325
      %v461 = vunpack.c.l.b16 %v326
      %v462 = vunpack.c.l.b16 %v327
      %v463 = vunpack.c.l.b16 %v328
      %v464 = vunpack.c.l.b16 %v329
      %v465 = vunpack.c.l.b16 %v330
      %v466 = vunpack.c.l.b16 %v331
      %v467 = vunpack.c.l.b16 %v332
      %v468 = vunpack.c.l.b16 %v333
      %v469 = vunpack.c.l.b16 %v334
      %v470 = vpack.c.b16 %v407, %v406
      %v471 = vpack.c.b16 %v409, %v408
      %v472 = vpack.c.b16 %v411, %v410
      %v473 = vpack.c.b16 %v413, %v412
      %v474 = vpack.c.b16 %v415, %v414
      %v475 = vpack.c.b16 %v417, %v416
      %v476 = vpack.c.b16 %v419, %v418
      %v477 = vpack.c.b16 %v421, %v420
      %v478 = vpack.c.b16 %v423, %v422
      %v479 = vpack.c.b16 %v425, %v424
      %v480 = vpack.c.b16 %v427, %v426
      %v481 = vpack.c.b16 %v429, %v428
      %v482 = vpack.c.b16 %v431, %v430
      %v483 = vpack.c.b16 %v433, %v432
      %v484 = vpack.c.b16 %v435, %v434
      %v485 = vpack.c.b16 %v437, %v436
      %v486 = vpack.c.b16 %v439, %v438
      %v487 = vpack.c.b16 %v441, %v440
      %v488 = vpack.c.b16 %v443, %v442
      %v489 = vpack.c.b16 %v445, %v444
      %v490 = vpack.c.b16 %v447, %v446
      %v491 = vpack.c.b16 %v449, %v448
      %v492 = vpack.c.b16 %v451, %v450
      %v493 = vpack.c.b16 %v453, %v452
      %v494 = vpack.c.b16 %v455, %v454
      %v495 = vpack.c.b16 %v457, %v456
      %v496 = vpack.c.b16 %v459, %v458
      %v497 = vpack.c.b16 %v461, %v460
      %v498 = vpack.c.b16 %v463, %v462
      %v499 = vpack.c.b16 %v465, %v464
      %v500 = vpack.c.b16 %v467, %v466
      %v501 = vpack.c.b16 %v469, %v468
      %534 = vmatprep.subr.bf16.mxu0 0
      %535 = vmatpush1.bf16.msra.mxu0 %v470
      %536 = vmatprep.subr.bf16.mxu0 0
      %537 = vmatpush1.bf16.msra.mxu0 %v471
      %538 = vmatprep.subr.bf16.mxu0 0
      %539 = vmatpush1.bf16.msra.mxu0 %v472
      %540 = vmatprep.subr.bf16.mxu0 0
      %541 = vmatpush1.bf16.msra.mxu0 %v473
      %542 = vmatprep.subr.bf16.mxu0 0
      %543 = vmatpush1.bf16.msra.mxu0 %v474
      %544 = vmatprep.subr.bf16.mxu0 0
      %545 = vmatpush1.bf16.msra.mxu0 %v475
      %546 = vmatprep.subr.bf16.mxu0 0
      %547 = vmatpush1.bf16.msra.mxu0 %v476
      %548 = vmatprep.subr.bf16.mxu0 0
      %549 = vmatpush1.bf16.msra.mxu0 %v477
      %550 = vmatprep.subr.bf16.mxu0 0
      %551 = vmatpush1.bf16.msra.mxu0 %v478
      %552 = vmatprep.subr.bf16.mxu0 0
      %553 = vmatpush1.bf16.msra.mxu0 %v479
      %554 = vmatprep.subr.bf16.mxu0 0
      %555 = vmatpush1.bf16.msra.mxu0 %v480
      %556 = vmatprep.subr.bf16.mxu0 0
      %557 = vmatpush1.bf16.msra.mxu0 %v481
      %558 = vmatprep.subr.bf16.mxu0 0
      %559 = vmatpush1.bf16.msra.mxu0 %v482
      %560 = vmatprep.subr.bf16.mxu0 0
      %561 = vmatpush1.bf16.msra.mxu0 %v483
      %562 = vmatprep.subr.bf16.mxu0 0
      %563 = vmatpush1.bf16.msra.mxu0 %v484
      %564 = vmatprep.subr.bf16.mxu0 0
      %565 = vmatpush1.bf16.msra.mxu0 %v485
      %566 = vmatprep.mubr.bf16.mxu0 %v268
      %567 = vmatmul.mubr.bf16.gmra.mrb[0].mxu0 %v267
      %v568 = vpop.f32.mrb[0].mxu0
      %v569 = vadd.f32 %v340, %v568
      %v570 = vpop.f32.mrb[0].mxu0
      %v571 = vpop.f32.mrb[0].mxu0
      %v572 = vadd.f32 %v340, %v571
      %v573 = vpop.f32.mrb[0].mxu0
      %574 = vdwg.mxu0
      %575 = vmatprep.subr.bf16.mxu0 0
      %576 = vmatpush1.bf16.msra.mxu0 %v486
      %577 = vmatprep.subr.bf16.mxu0 0
      %578 = vmatpush1.bf16.msra.mxu0 %v487
      %579 = vmatprep.subr.bf16.mxu0 0
      %580 = vmatpush1.bf16.msra.mxu0 %v488
      %581 = vmatprep.subr.bf16.mxu0 0
      %582 = vmatpush1.bf16.msra.mxu0 %v489
      %583 = vmatprep.subr.bf16.mxu0 0
      %584 = vmatpush1.bf16.msra.mxu0 %v490
      %585 = vmatprep.subr.bf16.mxu0 0
      %586 = vmatpush1.bf16.msra.mxu0 %v491
      %587 = vmatprep.subr.bf16.mxu0 0
      %588 = vmatpush1.bf16.msra.mxu0 %v492
      %589 = vmatprep.subr.bf16.mxu0 0
      %590 = vmatpush1.bf16.msra.mxu0 %v493
      %591 = vmatprep.subr.bf16.mxu0 0
      %592 = vmatpush1.bf16.msra.mxu0 %v494
      %593 = vmatprep.subr.bf16.mxu0 0
      %594 = vmatpush1.bf16.msra.mxu0 %v495
      %595 = vmatprep.subr.bf16.mxu0 0
      %596 = vmatpush1.bf16.msra.mxu0 %v496
      %597 = vmatprep.subr.bf16.mxu0 0
      %598 = vmatpush1.bf16.msra.mxu0 %v497
      %599 = vmatprep.subr.bf16.mxu0 0
      %600 = vmatpush1.bf16.msra.mxu0 %v498
      %601 = vmatprep.subr.bf16.mxu0 0
      %602 = vmatpush1.bf16.msra.mxu0 %v499
      %603 = vmatprep.subr.bf16.mxu0 0
      %604 = vmatpush1.bf16.msra.mxu0 %v500
      %605 = vmatprep.subr.bf16.mxu0 0
      %606 = vmatpush1.bf16.msra.mxu0 %v501
      %607 = vmatprep.mubr.bf16.mxu0 %v270
      %608 = vmatmul.mubr.bf16.gmra.mrb[0].mxu0 %v269
      %v609 = vpop.f32.mrb[0].mxu0
      %v610 = vadd.f32 %v569, %v609
      %v611 = vpop.f32.mrb[0].mxu0
      %v612 = vpop.f32.mrb[0].mxu0
      %v613 = vadd.f32 %v572, %v612
      %v614 = vpop.f32.mrb[0].mxu0
      %615 = vdwg.mxu0
      %v616 = vmax.f32 %v610, 0.0
      %v617 = vmax.f32 %v613, 0.0
      %v618 = vpack.c.bf16 %v617, %v616
      %v619 = vld [vmem:[%s3] sm:$0xf]
      %v620 = vld [vmem:[%s3 + $0x4] sm:$0xf]
      %v621 = vld [vmem:[%s3 + $0x8] sm:$0xf]
      %v622 = vld [vmem:[%s3 + $0xc] sm:$0xf]
      %v623 = vld [vmem:[%s3 + $0x10] sm:$0xf]
      %v624 = vld [vmem:[%s3 + $0x14] sm:$0xf]
      %v625 = vld [vmem:[%s3 + $0x18] sm:$0xf]
      %v626 = vld [vmem:[%s3 + $0x1c] sm:$0xf]
      %v627 = vld [vmem:[%s4] sm:$0x1]
      %v629 = vlaneseq
      %v630 = vshrl.u32 %v629, 7
      %v631 = vsub.s32 0, %v630
      %v632 = vrot.slane %v627, %v631
      %v642 = vunpack.c.l.b16 %v619
      %v643 = vunpack.c.l.b16 %v620
      %v644 = vunpack.c.l.b16 %v621
      %v645 = vunpack.c.l.b16 %v622
      %v646 = vunpack.c.l.b16 %v623
      %v647 = vunpack.c.l.b16 %v624
      %v648 = vunpack.c.l.b16 %v625
      %v649 = vunpack.c.l.b16 %v626
      %v650 = vpack.c.b16 %v643, %v642
      %v651 = vpack.c.b16 %v645, %v644
      %v652 = vpack.c.b16 %v647, %v646
      %v653 = vpack.c.b16 %v649, %v648
      %vm658 = vcmask 523264
      %v660 = vsel %vm658, %v618, 0
      %662 = vmatprep.subr.bf16.mxu0 0
      %663 = vmatpush1.bf16.msra.mxu0 %v650
      %664 = vmatprep.subr.bf16.mxu0 0
      %665 = vmatpush1.bf16.msra.mxu0 %v651
      %666 = vmatprep.subr.bf16.mxu0 0
      %667 = vmatpush1.bf16.msra.mxu0 %v652
      %668 = vmatprep.subr.bf16.mxu0 0
      %669 = vmatpush1.bf16.msra.mxu0 %v653
      %670 = vmatprep.subr.bf16.mxu0 0
      %671 = vmatpush1.bf16.msra.mxu0 0
      %672 = vmatprep.subr.bf16.mxu0 0
      %673 = vmatpush1.bf16.msra.mxu0 0
      %674 = vmatprep.subr.bf16.mxu0 0
      %675 = vmatpush1.bf16.msra.mxu0 0
      %676 = vmatprep.subr.bf16.mxu0 0
      %677 = vmatpush1.bf16.msra.mxu0 0
      %678 = vmatprep.subr.bf16.mxu0 0
      %679 = vmatpush1.bf16.msra.mxu0 0
      %680 = vmatprep.subr.bf16.mxu0 0
      %681 = vmatpush1.bf16.msra.mxu0 0
      %682 = vmatprep.subr.bf16.mxu0 0
      %683 = vmatpush1.bf16.msra.mxu0 0
      %684 = vmatprep.subr.bf16.mxu0 0
      %685 = vmatpush1.bf16.msra.mxu0 0
      %686 = vmatprep.subr.bf16.mxu0 0
      %687 = vmatpush1.bf16.msra.mxu0 0
      %688 = vmatprep.subr.bf16.mxu0 0
      %689 = vmatpush1.bf16.msra.mxu0 0
      %690 = vmatprep.subr.bf16.mxu0 0
      %691 = vmatpush1.bf16.msra.mxu0 0
      %692 = vmatprep.subr.bf16.mxu0 0
      %693 = vmatpush1.bf16.msra.mxu0 0
      %694 = vmatprep.mubr.bf16.mxu0 0
      %695 = vmatmul.mubr.bf16.gmra.mrb[0].mxu0 %v660
      %v696 = vpop.f32.mrb[0].mxu0
      %v697 = vadd.f32 %v632, %v696
      %v698 = vpop.f32.mrb[0].mxu0
      %v699 = vpop.f32.mrb[0].mxu0
      %v700 = vadd.f32 %v632, %v699
      %v701 = vpop.f32.mrb[0].mxu0
      %702 = vdwg.mxu0
      %v703 = vlaneseq
      %v704 = vand.u32 %v703, 127
      %v705 = vshra.s32 %v704, 3
      %706 = vrot.lane.b32.xlu0 %v697, 1
      %v707 = vpop.permute.xlu0 %706
      %708 = vrot.lane.b32.xlu0 %v700, 1
      %v709 = vpop.permute.xlu0 %708
      %710 = vrot.lane.b32.xlu0 %v697, 121
      %v711 = vpop.permute.xlu0 %710
      %712 = vrot.lane.b32.xlu0 %v700, 121
      %v713 = vpop.permute.xlu0 %712
      %714 = vrot.lane.b32.xlu0 %v704, 1
      %v715 = vpop.permute.xlu0 %714
      %v716 = vshra.s32 %v715, 3
      %vm717 = vcmp.eq.s32.totalorder %v716, %v705
      %v718 = vsel %vm717, %v707, %v711
      %v719 = vsel %vm717, %v709, %v713
      %v720 = vmax.f32 %v697, %v718
      %v721 = vmax.f32 %v700, %v719
      %722 = vrot.lane.b32.xlu0 %v720, 2
      %v723 = vpop.permute.xlu0 %722
      %724 = vrot.lane.b32.xlu0 %v721, 2
      %v725 = vpop.permute.xlu0 %724
      %726 = vrot.lane.b32.xlu0 %v720, 122
      %v727 = vpop.permute.xlu0 %726
      %728 = vrot.lane.b32.xlu0 %v721, 122
      %v729 = vpop.permute.xlu0 %728
      %730 = vrot.lane.b32.xlu0 %v704, 2
      %v731 = vpop.permute.xlu0 %730
      %v732 = vshra.s32 %v731, 3
      %vm733 = vcmp.eq.s32.totalorder %v732, %v705
      %v734 = vsel %vm733, %v723, %v727
      %v735 = vsel %vm733, %v725, %v729
      %v736 = vmax.f32 %v720, %v734
      %v737 = vmax.f32 %v721, %v735
      %738 = vrot.lane.b32.xlu0 %v736, 4
      %v739 = vpop.permute.xlu0 %738
      %740 = vrot.lane.b32.xlu0 %v737, 4
      %v741 = vpop.permute.xlu0 %740
      %742 = vrot.lane.b32.xlu0 %v736, 124
      %v743 = vpop.permute.xlu0 %742
      %744 = vrot.lane.b32.xlu0 %v737, 124
      %v745 = vpop.permute.xlu0 %744
      %746 = vrot.lane.b32.xlu0 %v704, 4
      %v747 = vpop.permute.xlu0 %746
      %v748 = vshra.s32 %v747, 3
      %vm749 = vcmp.eq.s32.totalorder %v748, %v705
      %v750 = vsel %vm749, %v739, %v743
      %v751 = vsel %vm749, %v741, %v745
      %v752 = vmax.f32 %v736, %v750
      %v753 = vmax.f32 %v737, %v751
      %v754 = vsub.f32 %v697, %v752
      %v755 = vsub.f32 %v700, %v753
      %v756 = vmul.f32 %v754, 1.442695
      %v757 = vpow.pop %v756
      %v758 = vmul.f32 %v755, 1.442695
      %v759 = vpow.pop %v758
      %v760 = vld [vmem:[%s5] sm:$0xff]
      %v761 = vld [vmem:[%s5 + $0x8] sm:$0xff]
      %v762 = vld [vmem:[%s5 + $0x10] sm:$0xff]
      %v763 = vld [vmem:[%s5 + $0x18] sm:$0xff]
      %v764 = vld [vmem:[%s5 + $0x20] sm:$0xff]
      %v765 = vld [vmem:[%s5 + $0x28] sm:$0xff]
      %v766 = vld [vmem:[%s5 + $0x30] sm:$0xff]
      %v767 = vld [vmem:[%s5 + $0x38] sm:$0xff]
      %v768 = vld [vmem:[%s5 + $0x40] sm:$0xff]
      %v769 = vld [vmem:[%s5 + $0x48] sm:$0xff]
      %v770 = vld [vmem:[%s5 + $0x50] sm:$0xff]
      %v771 = vld [vmem:[%s5 + $0x58] sm:$0xff]
      %v772 = vld [vmem:[%s5 + $0x60] sm:$0xff]
      %v773 = vld [vmem:[%s5 + $0x68] sm:$0xff]
      %v774 = vld [vmem:[%s5 + $0x70] sm:$0xff]
      %v775 = vld [vmem:[%s5 + $0x78] sm:$0xff]
      %776 = vmatprep.subr.mxu0 0.0
      %777 = vmatpush1.msra.mxu0 %v760
      %778 = vmatprep.subr.mxu0 0.0
      %779 = vmatpush1.msra.mxu0 %v761
      %780 = vmatprep.subr.mxu0 0.0
      %781 = vmatpush1.msra.mxu0 %v762
      %782 = vmatprep.subr.mxu0 0.0
      %783 = vmatpush1.msra.mxu0 %v763
      %784 = vmatprep.subr.mxu0 0.0
      %785 = vmatpush1.msra.mxu0 %v764
      %786 = vmatprep.subr.mxu0 0.0
      %787 = vmatpush1.msra.mxu0 %v765
      %788 = vmatprep.subr.mxu0 0.0
      %789 = vmatpush1.msra.mxu0 %v766
      %790 = vmatprep.subr.mxu0 0.0
      %791 = vmatpush1.msra.mxu0 %v767
      %792 = vmatprep.subr.mxu0 0.0
      %793 = vmatpush1.msra.mxu0 %v768
      %794 = vmatprep.subr.mxu0 0.0
      %795 = vmatpush1.msra.mxu0 %v769
      %796 = vmatprep.subr.mxu0 0.0
      %797 = vmatpush1.msra.mxu0 %v770
      %798 = vmatprep.subr.mxu0 0.0
      %799 = vmatpush1.msra.mxu0 %v771
      %800 = vmatprep.subr.mxu0 0.0
      %801 = vmatpush1.msra.mxu0 %v772
      %802 = vmatprep.subr.mxu0 0.0
      %803 = vmatpush1.msra.mxu0 %v773
      %804 = vmatprep.subr.mxu0 0.0
      %805 = vmatpush1.msra.mxu0 %v774
      %806 = vmatprep.subr.mxu0 0.0
      %807 = vmatpush1.msra.mxu0 %v775
      %808 = vmatprep.subr.mxu0 0.0
      %809 = vmatpush1.msra.mxu0 0.0
      %810 = vmatprep.subr.mxu0 0.0
      %811 = vmatpush1.msra.mxu0 0.0
      %812 = vmatprep.subr.mxu0 0.0
      %813 = vmatpush1.msra.mxu0 0.0
      %814 = vmatprep.subr.mxu0 0.0
      %815 = vmatpush1.msra.mxu0 0.0
      %816 = vmatprep.subr.mxu0 0.0
      %817 = vmatpush1.msra.mxu0 0.0
      %818 = vmatprep.subr.mxu0 0.0
      %819 = vmatpush1.msra.mxu0 0.0
      %820 = vmatprep.subr.mxu0 0.0
      %821 = vmatpush1.msra.mxu0 0.0
      %822 = vmatprep.subr.mxu0 0.0
      %823 = vmatpush1.msra.mxu0 0.0
      %824 = vmatprep.subr.mxu0 0.0
      %825 = vmatpush1.msra.mxu0 0.0
      %826 = vmatprep.subr.mxu0 0.0
      %827 = vmatpush1.msra.mxu0 0.0
      %828 = vmatprep.subr.mxu0 0.0
      %829 = vmatpush1.msra.mxu0 0.0
      %830 = vmatprep.subr.mxu0 0.0
      %831 = vmatpush1.msra.mxu0 0.0
      %832 = vmatprep.subr.mxu0 0.0
      %833 = vmatpush1.msra.mxu0 0.0
      %834 = vmatprep.subr.mxu0 0.0
      %835 = vmatpush1.msra.mxu0 0.0
      %836 = vmatprep.subr.mxu0 0.0
      %837 = vmatpush1.msra.mxu0 0.0
      %838 = vmatprep.subr.mxu0 0.0
      %839 = vmatpush1.msra.mxu0 0.0
      %840 = vmatprep.mubr.f32.mxu0 0.0
      %841 = vmatmul.mubr.f32.gmra.mrb[0].mxu0 %v757
      %v842 = vpop.f32.mrb[0].mxu0
      %v843 = vadd.f32 0.0, %v842
      %v844 = vpop.f32.mrb[0].mxu0
      %845 = vmatprep.mubr.f32.mxu0 0.0
      %846 = vmatmul.mubr.f32.gmra.mrb[0].mxu0 %v759
      %v847 = vpop.f32.mrb[0].mxu0
      %v848 = vadd.f32 0.0, %v847
      %v849 = vpop.f32.mrb[0].mxu0
      %850 = vdwg.mxu0
      %v851 = vrcp.pop %v843
      %v852 = vrcp.pop %v848
      %v853 = vmul.f32 %v757, %v851
      %v854 = vmul.f32 %v759, %v852
      %855 = vst [vmem:[%s256] sm:$0xff] %v853
      %856 = vst [vmem:[%s256 + $0x8] sm:$0xff] %v854
      %s857 = smul.u32 2, %s17
      %p858 = scmp.lt.s32.totalorder %s857, 3
      %s859 = scalar_select %p858, %s857, 3
      %s860 = smul.addr %s859, 8
      %s861 = scalar_lea.vmem %s6, %s860
      // Predicated region
      $region45: #{gating_network_forward.1} parent=43 // pred_check
        %p862 = pneg %p166
      $region46: #{gating_network_forward.1} parent=43 // pred_check_branch
        %864 = sbr.rel (%p862) target = $region48
      $region47: #{gating_network_forward.1} parent=43 // pred_region
        %s865 = smul.u32 2, %s17
      $region48: #{gating_network_forward.1} parent=43 // pred_fallthru
        _
    $region44: #{gating_network_forward.1} parent=5 // pred_fallthru
      _
    %p866 = scmp.le.s32.totalorder 2, %s12
    // Predicated region
    $region49: #{gating_network_forward.1} parent=5 // pred_check
      %p867 = pneg %p866
    $region50: #{gating_network_forward.1} parent=5 // pred_check_branch
      %869 = sbr.rel (%p867) target = $region52
    $region51: #{gating_network_forward.1} parent=5 // pred_region
      %s870 = ssub.s32 %s12, 2
      // Predicated region
      $region53: #{gating_network_forward.1} parent=51 // pred_check
        %p871 = pneg %p172
      $region54: #{gating_network_forward.1} parent=51 // pred_check_branch
        %873 = sbr.rel (%p871) target = $region56
      $region55: #{gating_network_forward.1} parent=51 // pred_region
        %s874 = smul.u32 2, %s18
        %p875 = scmp.lt.s32.totalorder %s874, 3
        %s876 = scalar_select %p875, %s874, 3
        %s877 = smul.addr %s876, 8
        %s878 = scalar_lea.vmem %s6, %s877
      $region56: #{gating_network_forward.1} parent=51 // pred_fallthru
        _
    $region52: #{gating_network_forward.1} parent=5 // pred_fallthru
      _
  $region6: #{gating_network_forward.1} parent=0 // loop_footer
    %s16 = sadd.s32 1, %s12
  $region7: #{gating_network_forward.1} parent=0 // loop_footer_branch
    %11 = sbr.rel target = $region3
  $region8: #{gating_network_forward.1} parent=0 // loop_exit
    _

</llo_original>
